<compile_context>
chip_gen: v7x
topology: tpu7x:2x2x1
jax: 0.10.0
libtpu: 0.0.40
codegen_flags: <defaults>
</compile_context>

<pallas_src>
import math
from functools import partial

import jax
import jax.numpy as jnp
from jax.experimental import pallas as pl
from jax.experimental.pallas import tpu as pltpu

_LANE = 128


def _round_up(n, m):
    return ((n + m - 1) // m) * m


def _rnn_seq_kernel(x_ref, h0_ref, wx_ref, wh_ref, b_ref, out_ref, h_ref):
    """One RNN-cell timestep.  Grid = (batch_block, time).

    x_ref  : (1, bm, I)     this step's input rows
    h0_ref : (bm, Hpad)     initial hidden (only read at t == 0)
    wx_ref : (I, Npad)      fused pre-transposed weights, input rows   [Wh | Wo] (zero padded)
    wh_ref : (Hpad, Npad)   fused pre-transposed weights, hidden rows  [Wh | Wo] (zero padded)
    b_ref  : (1, Npad)      fused bias (zero padded)
    out_ref: (1, bm, Opad)  this step's output (lane padded)
    h_ref  : (bm, Hpad) f32 carried hidden; VMEM-resident across the whole time
                            axis (constant index_map) and written back to HBM
                            once per batch block as the final hidden state.
    """
    t = pl.program_id(1)

    @pl.when(t == 0)
    def _():
        h_ref[...] = h0_ref[...].astype(h_ref.dtype)

    cdt = wx_ref.dtype  # compute dtype (bf16 or f32); cast in-kernel, acc stays f32
    acc = jnp.dot(x_ref[0].astype(cdt), wx_ref[...],
                  preferred_element_type=jnp.float32)
    acc = acc + jnp.dot(h_ref[...].astype(cdt), wh_ref[...],
                        preferred_element_type=jnp.float32)
    acc = acc + b_ref[...]

    hpad = h_ref.shape[1]
    h_ref[...] = acc[:, :hpad]                       # f32 carried hidden (128-lane slice)
    out_ref[0] = acc[:, hpad:].astype(out_ref.dtype)  # output columns (128-lane slice)


def prepare_params(w_i2h, b_i2h, w_i2o, b_i2o, input_size,
                   param_dtype=jnp.bfloat16):
    """Transpose + fuse + lane-pad the PyTorch-layout weights ONCE.

    Fused column layout: [0:H) = i2h (hidden), [Hpad:Hpad+O) = i2o (output);
    padded columns / rows are zero so they contribute nothing and the padded
    part of the carried hidden stays exactly zero."""
    H, D = w_i2h.shape
    O, D2 = w_i2o.shape
    assert D == D2 and D == input_size + H
    hpad = _round_up(H, _LANE)
    opad = _round_up(O, _LANE)
    npad = hpad + opad

    w_fused = jnp.zeros((D, npad), jnp.float32)
    w_fused = w_fused.at[:, :H].set(jnp.transpose(w_i2h))
    w_fused = w_fused.at[:, hpad:hpad + O].set(jnp.transpose(w_i2o))

    b_fused = jnp.zeros((1, npad), jnp.float32)
    b_fused = b_fused.at[0, :H].set(b_i2h)
    b_fused = b_fused.at[0, hpad:hpad + O].set(b_i2o)

    wx = w_fused[:input_size].astype(param_dtype)                       # (I, Npad)
    wh = (jnp.zeros((hpad, npad), jnp.float32)
          .at[:H].set(w_fused[input_size:])
          .astype(param_dtype))                                         # (Hpad, Npad)
    return wx, wh, b_fused, hpad, opad


@partial(jax.jit, static_argnames=("hidden_pad", "output_pad"))
def rnn_run_sequence(x_seq, hidden0_pad, wx, wh, b, *, hidden_pad, output_pad):
    """Run T RNN-cell steps inside ONE pallas_call.

    x_seq       : (T, B, I)    inputs
    hidden0_pad : (B, Hpad)    initial hidden (lane padded, pad cols zero)
    Returns (out_seq (T, B, Opad) f32, h_final (B, Hpad) f32)."""
    T, B, I = x_seq.shape
    hpad, opad = hidden_pad, output_pad
    npad = wx.shape[1]
    assert npad == hpad + opad
    assert wh.shape == (hpad, npad) and b.shape == (1, npad)
    assert hidden0_pad.shape == (B, hpad)

    # Batch tile: largest of these dividing B (megacore sharding + pipelining for
    # large batches); otherwise one full-batch block (tiny demo case).
    bm = B
    for cand in (1024, 512, 256, 128):
        if B % cand == 0:
            bm = cand
            break
    nb = B // bm
    grid = (nb, T)

    flops = 2 * T * B * (I + hpad) * npad
    bytes_accessed = (x_seq.size * x_seq.dtype.itemsize
                      + hidden0_pad.size * 4
                      + wx.size * wx.dtype.itemsize
                      + wh.size * wh.dtype.itemsize
                      + b.size * 4
                      + T * B * opad * 4 + B * hpad * 4)

    out_seq, h_final = pl.pallas_call(
        _rnn_seq_kernel,
        out_shape=(
            jax.ShapeDtypeStruct((T, B, opad), jnp.float32),
            jax.ShapeDtypeStruct((B, hpad), jnp.float32),
        ),
        grid=grid,
        in_specs=[
            pl.BlockSpec((1, bm, I), lambda bi, t: (t, bi, 0)),
            pl.BlockSpec((bm, hpad), lambda bi, t: (bi, 0)),
            pl.BlockSpec((I, npad), lambda bi, t: (0, 0)),     # weights resident
            pl.BlockSpec((hpad, npad), lambda bi, t: (0, 0)),  # across the time axis
            pl.BlockSpec((1, npad), lambda bi, t: (0, 0)),
        ],
        out_specs=(
            pl.BlockSpec((1, bm, opad), lambda bi, t: (t, bi, 0)),
            pl.BlockSpec((bm, hpad), lambda bi, t: (bi, 0)),   # carried hidden (accumulator)
        ),
        compiler_params=pltpu.CompilerParams(
            dimension_semantics=("parallel", "arbitrary")),
        cost_estimate=pl.CostEstimate(flops=flops, transcendentals=0,
                                      bytes_accessed=bytes_accessed),
    )(x_seq, hidden0_pad, wx, wh, b)
    return out_seq, h_final


def f_forward(x, hidden, wx, wh, b, *, hidden_size, output_size, hidden_pad, output_pad):
    """PyTorch `F.forward(input, hidden) -> (output, new_hidden)` (single step)."""
    B = x.shape[0]
    h0_pad = jnp.zeros((B, hidden_pad), jnp.float32).at[:, :hidden.shape[1]].set(hidden)
    out_seq, h_final = rnn_run_sequence(x[None], h0_pad, wx, wh, b,
                                        hidden_pad=hidden_pad, output_pad=output_pad)
    return out_seq[0, :, :output_size], h_final[:, :hidden_size]


def init_params(key, input_size, hidden_size, output_size):
    """Deterministic init mimicking PyTorch nn.Linear default (uniform +-1/sqrt(fan_in))."""
    d = input_size + hidden_size
    k1, k2, k3, k4 = jax.random.split(key, 4)
    bound = 1.0 / math.sqrt(d)
    w_i2h = jax.random.uniform(k1, (hidden_size, d), jnp.float32, -bound, bound)
    b_i2h = jax.random.uniform(k2, (hidden_size,), jnp.float32, -bound, bound)
    w_i2o = jax.random.uniform(k3, (output_size, d), jnp.float32, -bound, bound)
    b_i2o = jax.random.uniform(k4, (output_size,), jnp.float32, -bound, bound)
    return w_i2h, b_i2h, w_i2o, b_i2o


# TODO(synk): criterion (MSELoss), SGD optimizer and train_sample's backward pass are
# training-side code with no forward-kernel equivalent; only forward()/run_sample()
# iteration is implemented.

if __name__ == "__main__":
    input_size, hidden_size, output_size = 8, 32, 8
    batch, seq_len = 2, 8

    key = jax.random.PRNGKey(0)
    kx, kp = jax.random.split(key, 2)
    x_seq = jax.random.normal(kx, (seq_len, batch, input_size), jnp.float32)
    w_i2h, b_i2h, w_i2o, b_i2o = init_params(kp, input_size, hidden_size, output_size)

    # ---------------- f32 weight path: tight reference check ----------------
    wx, wh, bf, hpad, opad = prepare_params(w_i2h, b_i2h, w_i2o, b_i2o,
                                            input_size, param_dtype=jnp.float32)
    h0_pad = jnp.zeros((batch, hpad), jnp.float32)        # matches init_hidden()

    out_seq, h_final = rnn_run_sequence(x_seq, h0_pad, wx, wh, bf,
                                        hidden_pad=hpad, output_pad=opad)
    jax.block_until_ready((out_seq, h_final))

    # Single-step forward() API (PyTorch shapes).
    out1, hid1 = f_forward(x_seq[0], jnp.zeros((batch, hidden_size), jnp.float32),
                           wx, wh, bf, hidden_size=hidden_size, output_size=output_size,
                           hidden_pad=hpad, output_pad=opad)
    jax.block_until_ready((out1, hid1))

    # Pure-JAX reference (PyTorch forward semantics, looped over time).
    def ref_step(xv, hv):
        combined = jnp.concatenate([xv, hv], axis=1)
        return combined @ w_i2o.T + b_i2o, combined @ w_i2h.T + b_i2h

    h = jnp.zeros((batch, hidden_size), jnp.float32)
    ref_outs = []
    for t in range(seq_len):
        o, h = ref_step(x_seq[t], h)
        ref_outs.append(o)
    ref_outs = jnp.stack(ref_outs)
    ref_out1, ref_hid1 = ref_step(x_seq[0], jnp.zeros((batch, hidden_size), jnp.float32))

    assert jnp.allclose(out_seq[:, :, :output_size], ref_outs, atol=1e-4, rtol=1e-4), \
        "sequence output mismatch (f32)"
    assert jnp.allclose(h_final[:, :hidden_size], h, atol=1e-4, rtol=1e-4), \
        "final hidden mismatch (f32)"
    assert jnp.allclose(out1, ref_out1, atol=1e-4, rtol=1e-4), "forward() output mismatch"
    assert jnp.allclose(hid1, ref_hid1, atol=1e-4, rtol=1e-4), "forward() hidden mismatch"

    # ---------------- bf16 weight path (MXU-native default): loose check ----
    wx_b, wh_b, bf_b, _, _ = prepare_params(w_i2h, b_i2h, w_i2o, b_i2o,
                                            input_size, param_dtype=jnp.bfloat16)
    out_b, h_b = rnn_run_sequence(x_seq, h0_pad, wx_b, wh_b, bf_b,
                                  hidden_pad=hpad, output_pad=opad)
    jax.block_until_ready((out_b, h_b))
    assert jnp.allclose(out_b[:, :, :output_size], ref_outs, atol=1e-1, rtol=1e-1), \
        "sequence output mismatch (bf16)"
    assert jnp.allclose(h_b[:, :hidden_size], h, atol=1e-1, rtol=1e-1), \
        "final hidden mismatch (bf16)"

    print("KERNEL_OK")
</pallas_src>

<mosaic_0001>
module attributes {stable_mosaic.version = 11 : i64} {
  func.func @_rnn_seq_kernel(%arg0: i32, %arg1: i32, %arg2: memref<1x2x8xf32, #tpu.memory_space<vmem>>, %arg3: memref<2x128xf32, #tpu.memory_space<vmem>>, %arg4: memref<8x256xf32, #tpu.memory_space<vmem>>, %arg5: memref<128x256xf32, #tpu.memory_space<vmem>>, %arg6: memref<1x256xf32, #tpu.memory_space<vmem>>, %arg7: memref<1x2x128xf32, #tpu.memory_space<vmem>>, %arg8: memref<2x128xf32, #tpu.memory_space<vmem>>) attributes {dimension_semantics = [#tpu.dimension_semantics<parallel>, #tpu.dimension_semantics<arbitrary>], iteration_bounds = array<i64: 1, 8>, scalar_prefetch = 0 : i64, scratch_operands = 0 : i64, tpu.core_type = #tpu.core_type<tc>, window_params = [{transform_indices = @transform_0, window_bounds = array<i64: 1, 2, 8>}, {transform_indices = @transform_1, window_bounds = array<i64: 2, 128>}, {pipeline_mode = #tpu.pipeline_mode<synchronous>, transform_indices = @transform_2, window_bounds = array<i64: 8, 256>}, {pipeline_mode = #tpu.pipeline_mode<synchronous>, transform_indices = @transform_3, window_bounds = array<i64: 128, 256>}, {pipeline_mode = #tpu.pipeline_mode<synchronous>, transform_indices = @transform_4, window_bounds = array<i64: 1, 256>}, {transform_indices = @transform_5, window_bounds = array<i64: 1, 2, 128>}, {transform_indices = @transform_6, window_bounds = array<i64: 2, 128>}]} {
    %c0_i32 = arith.constant 0 : i32
    %0 = arith.cmpi eq, %arg1, %c0_i32 : i32
    %1 = arith.extui %0 : i1 to i32
    %c0_i32_0 = arith.constant 0 : i32
    %2 = arith.cmpi ne, %1, %c0_i32_0 : i32
    scf.if %2 {
      %c0_17 = arith.constant 0 : index
      %c0_18 = arith.constant 0 : index
      %20 = vector.load %arg3[%c0_17, %c0_18] : memref<2x128xf32, #tpu.memory_space<vmem>>, vector<2x128xf32>
      %c0_19 = arith.constant 0 : index
      %c0_20 = arith.constant 0 : index
      %21 = vector.load %arg8[%c0_19, %c0_20] : memref<2x128xf32, #tpu.memory_space<vmem>>, vector<2x128xf32>
      tpu.vector_store %arg8[%c0_19, %c0_20], %20 {strides = array<i32>} : memref<2x128xf32, #tpu.memory_space<vmem>>, vector<2x128xf32>,
    } else {
    }
    %c0 = arith.constant 0 : index
    %c0_1 = arith.constant 0 : index
    %c0_2 = arith.constant 0 : index
    %3 = vector.load %arg2[%c0, %c0_1, %c0_2] : memref<1x2x8xf32, #tpu.memory_space<vmem>>, vector<1x2x8xf32>
    %4 = vector.shape_cast %3 : vector<1x2x8xf32> to vector<2x8xf32>
    %c0_3 = arith.constant 0 : index
    %c0_4 = arith.constant 0 : index
    %5 = vector.load %arg4[%c0_3, %c0_4] : memref<8x256xf32, #tpu.memory_space<vmem>>, vector<8x256xf32>
    %cst = arith.constant dense<0.000000e+00> : vector<2x256xf32>
    %6 = tpu.matmul %4, %5, %cst {dimension_numbers = #tpu.dot_dimension_numbers<[1], [0], [0], [1], [0, 0, 1, 1], [], []>} : vector<2x8xf32>, vector<8x256xf32>, vector<2x256xf32> -> vector<2x256xf32>
    %c0_5 = arith.constant 0 : index
    %c0_6 = arith.constant 0 : index
    %7 = vector.load %arg8[%c0_5, %c0_6] : memref<2x128xf32, #tpu.memory_space<vmem>>, vector<2x128xf32>
    %c0_7 = arith.constant 0 : index
    %c0_8 = arith.constant 0 : index
    %8 = vector.load %arg5[%c0_7, %c0_8] : memref<128x256xf32, #tpu.memory_space<vmem>>, vector<128x256xf32>
    %cst_9 = arith.constant dense<0.000000e+00> : vector<2x256xf32>
    %9 = tpu.matmul %7, %8, %cst_9 {dimension_numbers = #tpu.dot_dimension_numbers<[1], [0], [0], [1], [0, 0, 1, 1], [], []>} : vector<2x128xf32>, vector<128x256xf32>, vector<2x256xf32> -> vector<2x256xf32>
    %10 = arith.addf %6, %9 : vector<2x256xf32>
    %c0_10 = arith.constant 0 : index
    %c0_11 = arith.constant 0 : index
    %11 = vector.load %arg6[%c0_10, %c0_11] : memref<1x256xf32, #tpu.memory_space<vmem>>, vector<1x256xf32>
    %12 = vector.broadcast %11 : vector<1x256xf32> to vector<2x256xf32>
    %13 = arith.addf %10, %12 : vector<2x256xf32>
    %14 = vector.extract_strided_slice %13 {offsets = [0, 0], sizes = [2, 128], strides = [1, 1]} : vector<2x256xf32> to vector<2x128xf32>
    %c0_12 = arith.constant 0 : index
    %c0_13 = arith.constant 0 : index
    %15 = vector.load %arg8[%c0_12, %c0_13] : memref<2x128xf32, #tpu.memory_space<vmem>>, vector<2x128xf32>
    tpu.vector_store %arg8[%c0_12, %c0_13], %14 {strides = array<i32>} : memref<2x128xf32, #tpu.memory_space<vmem>>, vector<2x128xf32>,
    %16 = vector.extract_strided_slice %13 {offsets = [0, 128], sizes = [2, 128], strides = [1, 1]} : vector<2x256xf32> to vector<2x128xf32>
    %c0_14 = arith.constant 0 : index
    %c0_15 = arith.constant 0 : index
    %c0_16 = arith.constant 0 : index
    %17 = vector.load %arg7[%c0_14, %c0_15, %c0_16] : memref<1x2x128xf32, #tpu.memory_space<vmem>>, vector<1x2x128xf32>
    %18 = vector.shape_cast %17 : vector<1x2x128xf32> to vector<2x128xf32>
    %19 = vector.shape_cast %16 : vector<2x128xf32> to vector<1x2x128xf32>
    tpu.vector_store %arg7[%c0_14, %c0_15, %c0_16], %19 {strides = array<i32>} : memref<1x2x128xf32, #tpu.memory_space<vmem>>, vector<1x2x128xf32>,
    return
  }
  func.func @transform_0(%arg0: i32, %arg1: i32) -> (i32, i32, i32) {
    %c0_i32 = arith.constant 0 : i32
    %c0_i32_0 = arith.constant 0 : i32
    return %arg1, %arg0, %c0_i32 : i32, i32, i32
  }
  func.func @transform_1(%arg0: i32, %arg1: i32) -> (i32, i32) {
    %c0_i32 = arith.constant 0 : i32
    %c0_i32_0 = arith.constant 0 : i32
    return %arg0, %c0_i32 : i32, i32
  }
  func.func @transform_2(%arg0: i32, %arg1: i32) -> (i32, i32) {
    %c0_i32 = arith.constant 0 : i32
    %c0_i32_0 = arith.constant 0 : i32
    %c0_i32_1 = arith.constant 0 : i32
    return %c0_i32, %c0_i32_0 : i32, i32
  }
  func.func @transform_3(%arg0: i32, %arg1: i32) -> (i32, i32) {
    %c0_i32 = arith.constant 0 : i32
    %c0_i32_0 = arith.constant 0 : i32
    %c0_i32_1 = arith.constant 0 : i32
    return %c0_i32, %c0_i32_0 : i32, i32
  }
  func.func @transform_4(%arg0: i32, %arg1: i32) -> (i32, i32) {
    %c0_i32 = arith.constant 0 : i32
    %c0_i32_0 = arith.constant 0 : i32
    %c0_i32_1 = arith.constant 0 : i32
    return %c0_i32, %c0_i32_0 : i32, i32
  }
  func.func @transform_5(%arg0: i32, %arg1: i32) -> (i32, i32, i32) {
    %c0_i32 = arith.constant 0 : i32
    %c0_i32_0 = arith.constant 0 : i32
    return %arg1, %arg0, %c0_i32 : i32, i32, i32
  }
  func.func @transform_6(%arg0: i32, %arg1: i32) -> (i32, i32) {
    %c0_i32 = arith.constant 0 : i32
    %c0_i32_0 = arith.constant 0 : i32
    return %arg0, %c0_i32 : i32, i32
  }
}

</mosaic_0001>

<llo_original>
// kernel: rnn_run_sequence.1
$region0: #{rnn_run_sequence.1}
  #allocation0 [shape = 'u32[]', space=smem, size = 0x4, offset = 0x4, fixed_abs, tag = 'smem constant byte address 0x4 - core index']
  #allocation1 [shape = 'u32[144,128]{1,0:T(1,128)}', space=vmem, size = 0x12000, scoped, tag = 'internal scratch']
  %s0 = inlined_call_operand.hbm [shape: f32[8,2,8], index: 0, kind: input, shape index: {}]
  %s1 = inlined_call_operand.vmem [shape: f32[2,128], index: 1, kind: input, shape index: {}]
  %s2 = inlined_call_operand.hbm [shape: f32[8,256], index: 2, kind: input, shape index: {}]
  %s3 = inlined_call_operand.hbm [shape: f32[128,256], index: 3, kind: input, shape index: {}]
  %s4 = inlined_call_operand.vmem [shape: f32[1,256], index: 4, kind: input, shape index: {}]
  %s5 = inlined_call_operand.hbm [shape: f32[8,2,128], index: 5, kind: output, shape index: {0}]
  %s6 = inlined_call_operand.hbm [shape: f32[2,128], index: 6, kind: output, shape index: {1}]
  %7 = xla_tuple %s5, %s6
  %s8 = sld [smem:[#allocation0]]
  $region77: #{rnn_run_sequence.1} parent=0
    _
  %s10 = ssub.s32 1, %s8
  %s11 = scalar_select 0, %s10, %s8
  $region1: #{rnn_run_sequence.1} parent=0
    #allocation2 [shape = 'u8[2048]{0}', space=vmem, size = 0x800, scoped, tag = 'input window, operand 0']
    #allocation3 [shape = 's32[2]{0}', space=sflag, size = 0x8, scoped, tag = 'scoped memory for rnn_run_sequence.1']
    #allocation4 [shape = 's32[2]{0}', space=sflag, size = 0x8, scoped, tag = 'scoped memory for rnn_run_sequence.1']
    #allocation5 [shape = 'u8[8192]{0}', space=vmem, size = 0x2000, scoped, tag = 'input window, operand 2, single buffered']
    #allocation6 [shape = 's32[1]{0}', space=sflag, size = 0x4, scoped, tag = 'scoped memory for rnn_run_sequence.1']
    #allocation7 [shape = 'u8[131072]{0}', space=vmem, size = 0x20000, scoped, tag = 'input window, operand 3, single buffered']
    #allocation8 [shape = 'u8[2048]{0}', space=vmem, size = 0x800, scoped, tag = 'output window, operand 0']
    #allocation9 [shape = 'u8[1024]{0}', space=vmem, size = 0x400, scoped, tag = 'output window, operand 1, single buffered']
    #allocation10 [shape = 's32[1]{0}', space=sflag, size = 0x4, scoped, tag = 'scoped memory for rnn_run_sequence.1']
    %12 = vsyncpa [#allocation3], 0
    %s13 = scalar_lea.sflag [#allocation3], 1
    %14 = vsyncpa %s13, 0
    %15 = vsyncpa [#allocation6], 0
    %16 = vsyncpa [#allocation4], 0
    %s17 = scalar_lea.sflag [#allocation4], 1
    %18 = vsyncpa %s17, 0
    %19 = vsyncpa [#allocation10], 0
    loop: start=0, step=1, limit=10
    $region2: #{rnn_run_sequence.1} parent=1 // loop_pre_header
      _
    $region3: #{rnn_run_sequence.1} parent=1 // loop_header
      %s21 = sphi 0, %s25
      %p22 = scmp.ge.s32.totalorder %s21, 10
      %s28 = sphi 0, %s40
      %s29 = sphi 0, %s36
      %s30 = sphi 0, %s28
      %s31 = sphi 0, %s29
      %s32 = sphi 0, %s30
      %s33 = sphi 0, %s31
      %s45 = sphi 0, %s47
      %s48 = sphi 0, %s45
      %s49 = sphi 0, %s48
      %s65 = sphi 0, %s49
      %s71 = sphi 0, %s73
      %s74 = sphi 0, %s71
      %s75 = sphi 0, %s74
      %s91 = sphi 0, %s75
      %s95 = sphi 0, %s95
      %s97 = sphi 0, %s95
      %s98 = sphi 0, %s97
      %s112 = sphi 0, %s98
      %s116 = sphi 0, %s116
      %s118 = sphi 0, %s116
      %s119 = sphi 0, %s118
      %s133 = sphi 0, %s119
      %s137 = sphi 0, %s137
      %s139 = sphi 0, %s137
      %s140 = sphi 0, %s139
      %s154 = sphi 0, %s140
      %s162 = sphi 0, %s164
      %s165 = sphi 0, %s162
      %s166 = sphi 0, %s165
      %s182 = sphi 0, %s166
      %s188 = sphi 0, %s190
      %s191 = sphi 0, %s188
      %s192 = sphi 0, %s191
      %s208 = sphi 0, %s192
    $region4: #{rnn_run_sequence.1} parent=1 // loop_header_branch
      %24 = sbr.rel (%p22) target = $region8
    $region5: #{rnn_run_sequence.1} parent=1 // loop_body
      %s26 = ssub.s32 %s21, 1
      %s27 = ssub.s32 %s21, 2
      %s34 = sadd.s32 1, %s29
      %p35 = scmp.ge.s32.totalorder %s34, 8
      %s36 = scalar_select %p35, 0, %s34
      %s37 = sadd.s32 1, %s28
      %s38 = scalar_select %p35, %s37, %s28
      %p39 = scmp.ge.s32.totalorder %s38, 1
      %s40 = scalar_select %p39, 0, %s38
      %s41 = ssub.s32 %s29, %s36
      %s42 = ssub.s32 %s28, %s40
      %s43 = sor.u32 %s41, %s42
      %p44 = scmp.eq.s32.totalorder %s43, 0
      %s46 = sadd.s32 %s45, 1
      %s47 = scalar_select %p44, %s45, %s46
      %p50 = pneg %p44
      %p51 = scmp.eq.s32.totalorder %s21, 7
      %p52 = por %p50, %p51
      %p53 = scmp.ne.s32.totalorder %s45, %s48
      %p54 = scmp.eq.s32.totalorder %s21, 0
      %p55 = por %p53, %p54
      %p56 = scmp.ne.s32.totalorder %s45, %s48
      %p57 = scmp.eq.s32.totalorder %s26, 7
      %p58 = por %p56, %p57
      %p59 = scmp.ne.s32.totalorder %s48, %s49
      %p60 = scmp.eq.s32.totalorder %s26, 0
      %p61 = por %p59, %p60
      %p62 = scmp.ne.s32.totalorder %s48, %s49
      %p63 = scmp.eq.s32.totalorder %s27, 7
      %p64 = por %p62, %p63
      %p66 = scmp.ne.s32.totalorder %s49, %s65
      %p67 = scmp.eq.s32.totalorder %s27, 0
      %p68 = por %p66, %p67
      %s69 = ssub.s32 %s28, %s40
      %p70 = scmp.eq.s32.totalorder %s69, 0
      %s72 = sadd.s32 %s71, 1
      %s73 = scalar_select %p70, %s71, %s72
      %p76 = pneg %p70
      %p77 = scmp.eq.s32.totalorder %s21, 7
      %p78 = por %p76, %p77
      %p79 = scmp.ne.s32.totalorder %s71, %s74
      %p80 = scmp.eq.s32.totalorder %s21, 0
      %p81 = por %p79, %p80
      %p82 = scmp.ne.s32.totalorder %s71, %s74
      %p83 = scmp.eq.s32.totalorder %s26, 7
      %p84 = por %p82, %p83
      %p85 = scmp.ne.s32.totalorder %s74, %s75
      %p86 = scmp.eq.s32.totalorder %s26, 0
      %p87 = por %p85, %p86
      %p88 = scmp.ne.s32.totalorder %s74, %s75
      %p89 = scmp.eq.s32.totalorder %s27, 7
      %p90 = por %p88, %p89
      %p92 = scmp.ne.s32.totalorder %s75, %s91
      %p93 = scmp.eq.s32.totalorder %s27, 0
      %p94 = por %p92, %p93
      %s96 = sadd.s32 %s95, 1
      %p99 = scmp.eq.s32.totalorder %s21, 7
      %p100 = scmp.ne.s32.totalorder %s95, %s97
      %p101 = scmp.eq.s32.totalorder %s21, 0
      %p102 = por %p100, %p101
      %p103 = scmp.ne.s32.totalorder %s95, %s97
      %p104 = scmp.eq.s32.totalorder %s26, 7
      %p105 = por %p103, %p104
      %p106 = scmp.ne.s32.totalorder %s97, %s98
      %p107 = scmp.eq.s32.totalorder %s26, 0
      %p108 = por %p106, %p107
      %p109 = scmp.ne.s32.totalorder %s97, %s98
      %p110 = scmp.eq.s32.totalorder %s27, 7
      %p111 = por %p109, %p110
      %p113 = scmp.ne.s32.totalorder %s98, %s112
      %p114 = scmp.eq.s32.totalorder %s27, 0
      %p115 = por %p113, %p114
      %s117 = sadd.s32 %s116, 1
      %p120 = scmp.eq.s32.totalorder %s21, 7
      %p121 = scmp.ne.s32.totalorder %s116, %s118
      %p122 = scmp.eq.s32.totalorder %s21, 0
      %p123 = por %p121, %p122
      %p124 = scmp.ne.s32.totalorder %s116, %s118
      %p125 = scmp.eq.s32.totalorder %s26, 7
      %p126 = por %p124, %p125
      %p127 = scmp.ne.s32.totalorder %s118, %s119
      %p128 = scmp.eq.s32.totalorder %s26, 0
      %p129 = por %p127, %p128
      %p130 = scmp.ne.s32.totalorder %s118, %s119
      %p131 = scmp.eq.s32.totalorder %s27, 7
      %p132 = por %p130, %p131
      %p134 = scmp.ne.s32.totalorder %s119, %s133
      %p135 = scmp.eq.s32.totalorder %s27, 0
      %p136 = por %p134, %p135
      %s138 = sadd.s32 %s137, 1
      %p141 = scmp.eq.s32.totalorder %s21, 7
      %p142 = scmp.ne.s32.totalorder %s137, %s139
      %p143 = scmp.eq.s32.totalorder %s21, 0
      %p144 = por %p142, %p143
      %p145 = scmp.ne.s32.totalorder %s137, %s139
      %p146 = scmp.eq.s32.totalorder %s26, 7
      %p147 = por %p145, %p146
      %p148 = scmp.ne.s32.totalorder %s139, %s140
      %p149 = scmp.eq.s32.totalorder %s26, 0
      %p150 = por %p148, %p149
      %p151 = scmp.ne.s32.totalorder %s139, %s140
      %p152 = scmp.eq.s32.totalorder %s27, 7
      %p153 = por %p151, %p152
      %p155 = scmp.ne.s32.totalorder %s140, %s154
      %p156 = scmp.eq.s32.totalorder %s27, 0
      %p157 = por %p155, %p156
      %s158 = ssub.s32 %s29, %s36
      %s159 = ssub.s32 %s28, %s40
      %s160 = sor.u32 %s158, %s159
      %p161 = scmp.eq.s32.totalorder %s160, 0
      %s163 = sadd.s32 %s162, 1
      %s164 = scalar_select %p161, %s162, %s163
      %p167 = pneg %p161
      %p168 = scmp.eq.s32.totalorder %s21, 7
      %p169 = por %p167, %p168
      %p170 = scmp.ne.s32.totalorder %s162, %s165
      %p171 = scmp.eq.s32.totalorder %s21, 0
      %p172 = por %p170, %p171
      %p173 = scmp.ne.s32.totalorder %s162, %s165
      %p174 = scmp.eq.s32.totalorder %s26, 7
      %p175 = por %p173, %p174
      %p176 = scmp.ne.s32.totalorder %s165, %s166
      %p177 = scmp.eq.s32.totalorder %s26, 0
      %p178 = por %p176, %p177
      %p179 = scmp.ne.s32.totalorder %s165, %s166
      %p180 = scmp.eq.s32.totalorder %s27, 7
      %p181 = por %p179, %p180
      %p183 = scmp.ne.s32.totalorder %s166, %s182
      %p184 = scmp.eq.s32.totalorder %s27, 0
      %p185 = por %p183, %p184
      %s186 = ssub.s32 %s28, %s40
      %p187 = scmp.eq.s32.totalorder %s186, 0
      %s189 = sadd.s32 %s188, 1
      %s190 = scalar_select %p187, %s188, %s189
      %p193 = pneg %p187
      %p194 = scmp.eq.s32.totalorder %s21, 7
      %p195 = por %p193, %p194
      %p196 = scmp.ne.s32.totalorder %s188, %s191
      %p197 = scmp.eq.s32.totalorder %s21, 0
      %p198 = por %p196, %p197
      %p199 = scmp.ne.s32.totalorder %s188, %s191
      %p200 = scmp.eq.s32.totalorder %s26, 7
      %p201 = por %p199, %p200
      %p202 = scmp.ne.s32.totalorder %s191, %s192
      %p203 = scmp.eq.s32.totalorder %s26, 0
      %p204 = por %p202, %p203
      %p205 = scmp.ne.s32.totalorder %s191, %s192
      %p206 = scmp.eq.s32.totalorder %s27, 7
      %p207 = por %p205, %p206
      %p209 = scmp.ne.s32.totalorder %s192, %s208
      %p210 = scmp.eq.s32.totalorder %s27, 0
      %p211 = por %p209, %p210
      %p212 = scmp.le.s32.totalorder 1, %s21
      %p213 = scmp.lt.s32.totalorder %s21, 9
      %p214 = pnand %p212, %p213
      %p215 = pneg %p214
      // Predicated region
      $region9: #{rnn_run_sequence.1} parent=5 // pred_check
        _
      $region10: #{rnn_run_sequence.1} parent=5 // pred_check_branch
        %217 = sbr.rel (%p214) target = $region12
      $region11: #{rnn_run_sequence.1} parent=5 // pred_region
        %s218 = ssub.s32 %s21, 1
        // Predicated region
        $region13: #{rnn_run_sequence.1} parent=11 // pred_check
          %p219 = pneg %p87
        $region14: #{rnn_run_sequence.1} parent=11 // pred_check_branch
          %221 = sbr.rel (%p219) target = $region16
        $region15: #{rnn_run_sequence.1} parent=11 // pred_region
          %p222 = scmp.lt.s32.totalorder %s30, 0
          %s223 = scalar_select %p222, %s30, 0
          %s224 = smul.addr %s223, 2
          %s225 = scalar_lea.vmem %s1, %s224
        $region16: #{rnn_run_sequence.1} parent=11 // pred_fallthru
          _
        // Predicated region
        $region17: #{rnn_run_sequence.1} parent=11 // pred_check
          %p226 = pneg %p108
        $region18: #{rnn_run_sequence.1} parent=11 // pred_check_branch
          %228 = sbr.rel (%p226) target = $region20
        $region19: #{rnn_run_sequence.1} parent=11 // pred_region
          %s230 = ssub.s32 256, 256
          %231 = vsyncadd [#allocation6], %s230
          %s233 = sshll.u32 [#allocation5], 4
          %s234 = int_to_ptr.vmem [resolvable:$true] %s233
          %236 = dma.hbm_to_vmem [thread:$0]  %s2, 256, %s234, [#allocation6]
        $region20: #{rnn_run_sequence.1} parent=11 // pred_fallthru
          _
        // Predicated region
        $region21: #{rnn_run_sequence.1} parent=11 // pred_check
          %p237 = pneg %p129
        $region22: #{rnn_run_sequence.1} parent=11 // pred_check_branch
          %239 = sbr.rel (%p237) target = $region24
        $region23: #{rnn_run_sequence.1} parent=11 // pred_region
          %s241 = ssub.s32 4096, 4096
          %242 = vsyncadd [#allocation6], %s241
          %s243 = sshll.u32 [#allocation7], 4
          %s244 = int_to_ptr.vmem [resolvable:$true] %s243
          %249 = dma.hbm_to_vmem [thread:$0]  %s3, 4096, %s244, [#allocation6], 256, 256, 16
        $region24: #{rnn_run_sequence.1} parent=11 // pred_fallthru
          _
        // Predicated region
        $region25: #{rnn_run_sequence.1} parent=11 // pred_check
          %p250 = pneg %p150
        $region26: #{rnn_run_sequence.1} parent=11 // pred_check_branch
          %252 = sbr.rel (%p250) target = $region28
        $region27: #{rnn_run_sequence.1} parent=11 // pred_region
          _
        $region28: #{rnn_run_sequence.1} parent=11 // pred_fallthru
          _
      $region12: #{rnn_run_sequence.1} parent=5 // pred_fallthru
        _
      %p253 = scmp.lt.s32.totalorder %s21, 8
      // Predicated region
      $region29: #{rnn_run_sequence.1} parent=5 // pred_check
        %p254 = pneg %p253
      $region30: #{rnn_run_sequence.1} parent=5 // pred_check_branch
        %256 = sbr.rel (%p254) target = $region32
      $region31: #{rnn_run_sequence.1} parent=5 // pred_region
        // Predicated region
        $region33: #{rnn_run_sequence.1} parent=31 // pred_check
          %p257 = pneg %p55
        $region34: #{rnn_run_sequence.1} parent=31 // pred_check_branch
          %259 = sbr.rel (%p257) target = $region36
        $region35: #{rnn_run_sequence.1} parent=31 // pred_region
          %s260 = sand.u32 %s45, 1
          %s261 = scalar_lea.sflag [#allocation3], %s260
          %s262 = sand.u32 %s45, 1
          %s263 = smul.addr %s262, 2
          %s264 = scalar_lea.vmem [#allocation2], %s263
          %s266 = ssub.s32 32, 32
          %267 = vsyncadd %s261, %s266
          %s268 = sadd.s32 %s28, %s29
          %s269 = smul.addr %s268, 32
          %s270 = scalar_lea.hbm %s0, %s269
          %s272 = sshll.u32 %s264, 4
          %s273 = int_to_ptr.vmem [resolvable:$true] %s272
          %275 = dma.hbm_to_vmem [thread:$0]  %s270, 32, %s273, %s261
        $region36: #{rnn_run_sequence.1} parent=31 // pred_fallthru
          _
      $region32: #{rnn_run_sequence.1} parent=5 // pred_fallthru
        _
      %p276 = scmp.le.s32.totalorder 1, %s21
      %p277 = scmp.lt.s32.totalorder %s21, 9
      %p278 = pnand %p276, %p277
      %p279 = pneg %p278
      // Predicated region
      $region37: #{rnn_run_sequence.1} parent=5 // pred_check
        _
      $region38: #{rnn_run_sequence.1} parent=5 // pred_check_branch
        %281 = sbr.rel (%p278) target = $region40
      $region39: #{rnn_run_sequence.1} parent=5 // pred_region
        %s282 = ssub.s32 %s21, 1
        %s283 = sand.u32 %s48, 1
        %s284 = scalar_lea.sflag [#allocation3], %s283
        %s285 = sand.u32 %s48, 1
        %s286 = smul.addr %s285, 2
        %s287 = scalar_lea.vmem [#allocation2], %s286
        // Predicated region
        $region41: #{rnn_run_sequence.1} parent=39 // pred_check
          %p288 = pneg %p61
        $region42: #{rnn_run_sequence.1} parent=39 // pred_check_branch
          %290 = sbr.rel (%p288) target = $region44
        $region43: #{rnn_run_sequence.1} parent=39 // pred_region
          %291 = dma.done %s284, 32
        $region44: #{rnn_run_sequence.1} parent=39 // pred_fallthru
          _
        // Predicated region
        $region45: #{rnn_run_sequence.1} parent=39 // pred_check
          %p292 = pneg %p108
        $region46: #{rnn_run_sequence.1} parent=39 // pred_check_branch
          %294 = sbr.rel (%p292) target = $region48
        $region47: #{rnn_run_sequence.1} parent=39 // pred_region
          %295 = dma.done [#allocation6], 256
        $region48: #{rnn_run_sequence.1} parent=39 // pred_fallthru
          _
        // Predicated region
        $region49: #{rnn_run_sequence.1} parent=39 // pred_check
          %p296 = pneg %p129
        $region50: #{rnn_run_sequence.1} parent=39 // pred_check_branch
          %298 = sbr.rel (%p296) target = $region52
        $region51: #{rnn_run_sequence.1} parent=39 // pred_region
          %299 = dma.done [#allocation6], 4096
        $region52: #{rnn_run_sequence.1} parent=39 // pred_fallthru
          _
        %s300 = sand.u32 %s48, 1
        %s301 = scalar_lea.sflag [#allocation3], %s300
        %s302 = sand.u32 %s48, 1
        %s303 = smul.addr %s302, 2
        %s304 = scalar_lea.vmem [#allocation2], %s303
        %p305 = pneg %p61
        %p306 = pneg %p58
        %p307 = scmp.lt.s32.totalorder %s30, 0
        %s308 = scalar_select %p307, %s30, 0
        %s309 = smul.addr %s308, 2
        %s310 = scalar_lea.vmem %s1, %s309
        %p311 = pneg %p87
        %p312 = pneg %p84
        %p313 = pneg %p108
        %p314 = pneg %p105
        %p315 = pneg %p129
        %p316 = pneg %p126
        %p317 = pneg %p150
        %p318 = pneg %p147
        %p319 = pneg %p178
        %p320 = pneg %p175
        %s321 = sand.u32 %s165, 1
        %s322 = scalar_lea.sflag [#allocation4], %s321
        %s323 = sand.u32 %s165, 1
        %s324 = smul.addr %s323, 2
        %s325 = scalar_lea.vmem [#allocation8], %s324
        %p326 = pneg %p204
        %p327 = pneg %p201
        %p328 = scmp.lt.s32.totalorder %s30, 0
        %s329 = scalar_select %p328, %s30, 0
        %s330 = smul.addr %s329, 2
        %s331 = scalar_lea.vmem %s1, %s330
        %p332 = scmp.eq.s32.totalorder %s31, 0
        // Predicated region
        $region53: #{rnn_run_sequence.1} parent=39 // pred_check
          %p333 = pneg %p332
        $region54: #{rnn_run_sequence.1} parent=39 // pred_check_branch
          %335 = sbr.rel (%p333) target = $region56
        $region55: #{rnn_run_sequence.1} parent=39 // pred_region
          %v336 = vld [vmem:[%s331] sm:$0x3]
          %337 = vst [vmem:[#allocation9] sm:$0x3] %v336
        $region56: #{rnn_run_sequence.1} parent=39 // pred_fallthru
          _
        %v338 = vld [vmem:[%s287] sm:$0x3]
        %v339 = vld [vmem:[#allocation5] sm:$0xff]
        %v340 = vld [vmem:[#allocation5 + $0x8] sm:$0xff]
        %v341 = vld [vmem:[#allocation9] sm:$0x3]
        %v342 = vld [vmem:[#allocation7] sm:$0xff]
        %v343 = vld [vmem:[#allocation7 + $0x8] sm:$0xff]
        %v344 = vld [vmem:[#allocation7 + $0x10] sm:$0xff]
        %v345 = vld [vmem:[#allocation7 + $0x18] sm:$0xff]
        %v346 = vld [vmem:[#allocation7 + $0x20] sm:$0xff]
        %v347 = vld [vmem:[#allocation7 + $0x28] sm:$0xff]
        %v348 = vld [vmem:[#allocation7 + $0x30] sm:$0xff]
        %v349 = vld [vmem:[#allocation7 + $0x38] sm:$0xff]
        %v350 = vld [vmem:[#allocation7 + $0x40] sm:$0xff]
        %v351 = vld [vmem:[#allocation7 + $0x48] sm:$0xff]
        %v352 = vld [vmem:[#allocation7 + $0x50] sm:$0xff]
        %v353 = vld [vmem:[#allocation7 + $0x58] sm:$0xff]
        %v354 = vld [vmem:[#allocation7 + $0x60] sm:$0xff]
        %v355 = vld [vmem:[#allocation7 + $0x68] sm:$0xff]
        %v356 = vld [vmem:[#allocation7 + $0x70] sm:$0xff]
        %v357 = vld [vmem:[#allocation7 + $0x78] sm:$0xff]
        %v358 = vld [vmem:[#allocation7 + $0x80] sm:$0xff]
        %v359 = vld [vmem:[#allocation7 + $0x88] sm:$0xff]
        %v360 = vld [vmem:[#allocation7 + $0x90] sm:$0xff]
        %v361 = vld [vmem:[#allocation7 + $0x98] sm:$0xff]
        %v362 = vld [vmem:[#allocation7 + $0xa0] sm:$0xff]
        %v363 = vld [vmem:[#allocation7 + $0xa8] sm:$0xff]
        %v364 = vld [vmem:[#allocation7 + $0xb0] sm:$0xff]
        %v365 = vld [vmem:[#allocation7 + $0xb8] sm:$0xff]
        %v366 = vld [vmem:[#allocation7 + $0xc0] sm:$0xff]
        %v367 = vld [vmem:[#allocation7 + $0xc8] sm:$0xff]
        %v368 = vld [vmem:[#allocation7 + $0xd0] sm:$0xff]
        %v369 = vld [vmem:[#allocation7 + $0xd8] sm:$0xff]
        %v370 = vld [vmem:[#allocation7 + $0xe0] sm:$0xff]
        %v371 = vld [vmem:[#allocation7 + $0xe8] sm:$0xff]
        %v372 = vld [vmem:[#allocation7 + $0xf0] sm:$0xff]
        %v373 = vld [vmem:[#allocation7 + $0xf8] sm:$0xff]
        %374 = vmatprep.subr.mxu0 %v343
        %375 = vmatpush1.msra.mxu0 %v342
        %376 = vmatprep.subr.mxu0 %v345
        %377 = vmatpush1.msra.mxu0 %v344
        %378 = vmatprep.subr.mxu0 %v347
        %379 = vmatpush1.msra.mxu0 %v346
        %380 = vmatprep.subr.mxu0 %v349
        %381 = vmatpush1.msra.mxu0 %v348
        %382 = vmatprep.subr.mxu0 %v351
        %383 = vmatpush1.msra.mxu0 %v350
        %384 = vmatprep.subr.mxu0 %v353
        %385 = vmatpush1.msra.mxu0 %v352
        %386 = vmatprep.subr.mxu0 %v355
        %387 = vmatpush1.msra.mxu0 %v354
        %388 = vmatprep.subr.mxu0 %v357
        %389 = vmatpush1.msra.mxu0 %v356
        %390 = vmatprep.subr.mxu0 %v359
        %391 = vmatpush1.msra.mxu0 %v358
        %392 = vmatprep.subr.mxu0 %v361
        %393 = vmatpush1.msra.mxu0 %v360
        %394 = vmatprep.subr.mxu0 %v363
        %395 = vmatpush1.msra.mxu0 %v362
        %396 = vmatprep.subr.mxu0 %v365
        %397 = vmatpush1.msra.mxu0 %v364
        %398 = vmatprep.subr.mxu0 %v367
        %399 = vmatpush1.msra.mxu0 %v366
        %400 = vmatprep.subr.mxu0 %v369
        %401 = vmatpush1.msra.mxu0 %v368
        %402 = vmatprep.subr.mxu0 %v371
        %403 = vmatpush1.msra.mxu0 %v370
        %404 = vmatprep.subr.mxu0 %v373
        %405 = vmatpush1.msra.mxu0 %v372
        %406 = vmatprep.subr.mxu0 0.0
        %407 = vmatpush1.msra.mxu0 0.0
        %408 = vmatprep.subr.mxu0 0.0
        %409 = vmatpush1.msra.mxu0 0.0
        %410 = vmatprep.subr.mxu0 0.0
        %411 = vmatpush1.msra.mxu0 0.0
        %412 = vmatprep.subr.mxu0 0.0
        %413 = vmatpush1.msra.mxu0 0.0
        %414 = vmatprep.subr.mxu0 0.0
        %415 = vmatpush1.msra.mxu0 0.0
        %416 = vmatprep.subr.mxu0 0.0
        %417 = vmatpush1.msra.mxu0 0.0
        %418 = vmatprep.subr.mxu0 0.0
        %419 = vmatpush1.msra.mxu0 0.0
        %420 = vmatprep.subr.mxu0 0.0
        %421 = vmatpush1.msra.mxu0 0.0
        %422 = vmatprep.subr.mxu0 0.0
        %423 = vmatpush1.msra.mxu0 0.0
        %424 = vmatprep.subr.mxu0 0.0
        %425 = vmatpush1.msra.mxu0 0.0
        %426 = vmatprep.subr.mxu0 0.0
        %427 = vmatpush1.msra.mxu0 0.0
        %428 = vmatprep.subr.mxu0 0.0
        %429 = vmatpush1.msra.mxu0 0.0
        %430 = vmatprep.subr.mxu0 0.0
        %431 = vmatpush1.msra.mxu0 0.0
        %432 = vmatprep.subr.mxu0 0.0
        %433 = vmatpush1.msra.mxu0 0.0
        %434 = vmatprep.subr.mxu0 0.0
        %435 = vmatpush1.msra.mxu0 0.0
        %436 = vmatprep.subr.mxu0 0.0
        %437 = vmatpush1.msra.mxu0 0.0
        %438 = vmatprep.mubr.f32.mxu0 0.0
        %439 = vmatmul.mubr.f32.gmra.mrb[0].mxu0 %v341
        %v440 = vpop.f32.mrb[0].mxu0
        %v441 = vadd.f32 0.0, %v440
        %v442 = vpop.f32.mrb[0].mxu0
        %v443 = vadd.f32 0.0, %v442
        %444 = vdwg.mxu0
        %vm445 = vcmask 64512
        %v447 = vsel %vm445, %v338, 0
        %449 = vmatprep.subr.mxu0 %v340
        %450 = vmatpush1.msra.mxu0 %v339
        %451 = vmatprep.subr.mxu0 0.0
        %452 = vmatpush1.msra.mxu0 0.0
        %453 = vmatprep.subr.mxu0 0.0
        %454 = vmatpush1.msra.mxu0 0.0
        %455 = vmatprep.subr.mxu0 0.0
        %456 = vmatpush1.msra.mxu0 0.0
        %457 = vmatprep.subr.mxu0 0.0
        %458 = vmatpush1.msra.mxu0 0.0
        %459 = vmatprep.subr.mxu0 0.0
        %460 = vmatpush1.msra.mxu0 0.0
        %461 = vmatprep.subr.mxu0 0.0
        %462 = vmatpush1.msra.mxu0 0.0
        %463 = vmatprep.subr.mxu0 0.0
        %464 = vmatpush1.msra.mxu0 0.0
        %465 = vmatprep.subr.mxu0 0.0
        %466 = vmatpush1.msra.mxu0 0.0
        %467 = vmatprep.subr.mxu0 0.0
        %468 = vmatpush1.msra.mxu0 0.0
        %469 = vmatprep.subr.mxu0 0.0
        %470 = vmatpush1.msra.mxu0 0.0
        %471 = vmatprep.subr.mxu0 0.0
        %472 = vmatpush1.msra.mxu0 0.0
        %473 = vmatprep.subr.mxu0 0.0
        %474 = vmatpush1.msra.mxu0 0.0
        %475 = vmatprep.subr.mxu0 0.0
        %476 = vmatpush1.msra.mxu0 0.0
        %477 = vmatprep.subr.mxu0 0.0
        %478 = vmatpush1.msra.mxu0 0.0
        %479 = vmatprep.subr.mxu0 0.0
        %480 = vmatpush1.msra.mxu0 0.0
        %481 = vmatprep.subr.mxu0 0.0
        %482 = vmatpush1.msra.mxu0 0.0
        %483 = vmatprep.subr.mxu0 0.0
        %484 = vmatpush1.msra.mxu0 0.0
        %485 = vmatprep.subr.mxu0 0.0
        %486 = vmatpush1.msra.mxu0 0.0
        %487 = vmatprep.subr.mxu0 0.0
        %488 = vmatpush1.msra.mxu0 0.0
        %489 = vmatprep.subr.mxu0 0.0
        %490 = vmatpush1.msra.mxu0 0.0
        %491 = vmatprep.subr.mxu0 0.0
        %492 = vmatpush1.msra.mxu0 0.0
        %493 = vmatprep.subr.mxu0 0.0
        %494 = vmatpush1.msra.mxu0 0.0
        %495 = vmatprep.subr.mxu0 0.0
        %496 = vmatpush1.msra.mxu0 0.0
        %497 = vmatprep.subr.mxu0 0.0
        %498 = vmatpush1.msra.mxu0 0.0
        %499 = vmatprep.subr.mxu0 0.0
        %500 = vmatpush1.msra.mxu0 0.0
        %501 = vmatprep.subr.mxu0 0.0
        %502 = vmatpush1.msra.mxu0 0.0
        %503 = vmatprep.subr.mxu0 0.0
        %504 = vmatpush1.msra.mxu0 0.0
        %505 = vmatprep.subr.mxu0 0.0
        %506 = vmatpush1.msra.mxu0 0.0
        %507 = vmatprep.subr.mxu0 0.0
        %508 = vmatpush1.msra.mxu0 0.0
        %509 = vmatprep.subr.mxu0 0.0
        %510 = vmatpush1.msra.mxu0 0.0
        %511 = vmatprep.subr.mxu0 0.0
        %512 = vmatpush1.msra.mxu0 0.0
        %513 = vmatprep.mubr.f32.mxu0 0.0
        %514 = vmatmul.mubr.f32.gmra.mrb[0].mxu0 %v447
        %v515 = vpop.f32.mrb[0].mxu0
        %v516 = vadd.f32 %v441, %v515
        %v517 = vpop.f32.mrb[0].mxu0
        %v518 = vadd.f32 %v443, %v517
        %519 = vdwg.mxu0
        %v520 = vld [vmem:[%s4] sm:$0x3]
        %v522 = vlaneseq
        %v523 = vshrl.u32 %v522, 7
        %v524 = vsub.s32 0, %v523
        %v525 = vrot.slane %v520, %v524
        %v526 = vlaneseq
        %v527 = vshrl.u32 %v526, 7
        %v528 = vsub.s32 1, %v527
        %v529 = vrot.slane %v520, %v528
        %v532 = vadd.f32 %v516, %v525
        %v533 = vadd.f32 %v518, %v529
        %534 = vst [vmem:[#allocation9] sm:$0x3] %v532
        %535 = vst [vmem:[%s325] sm:$0x3] %v533
        %s536 = sand.u32 %s165, 1
        %s537 = scalar_lea.sflag [#allocation4], %s536
        %s538 = sand.u32 %s165, 1
        %s539 = smul.addr %s538, 2
        %s540 = scalar_lea.vmem [#allocation8], %s539
        // Predicated region
        $region57: #{rnn_run_sequence.1} parent=39 // pred_check
          %p541 = pneg %p175
        $region58: #{rnn_run_sequence.1} parent=39 // pred_check_branch
          %543 = sbr.rel (%p541) target = $region60
        $region59: #{rnn_run_sequence.1} parent=39 // pred_region
          %s545 = ssub.s32 32, 32
          %546 = vsyncadd %s537, %s545
          %s547 = sadd.s32 %s30, %s31
          %s548 = smul.addr %s547, 32
          %s549 = scalar_lea.hbm %s5, %s548
          %s551 = sshll.u32 %s540, 4
          %s552 = int_to_ptr.vmem [resolvable:$true] %s551
          %554 = dma.vmem_to_hbm [thread:$0]  %s552, 32, %s549, %s537
        $region60: #{rnn_run_sequence.1} parent=39 // pred_fallthru
          _
        // Predicated region
        $region61: #{rnn_run_sequence.1} parent=39 // pred_check
          %p555 = pneg %p201
        $region62: #{rnn_run_sequence.1} parent=39 // pred_check_branch
          %557 = sbr.rel (%p555) target = $region64
        $region63: #{rnn_run_sequence.1} parent=39 // pred_region
          %s559 = ssub.s32 32, 32
          %560 = vsyncadd [#allocation10], %s559
          %s561 = smul.addr %s30, 32
          %s562 = scalar_lea.hbm %s6, %s561
          %s564 = sshll.u32 [#allocation9], 4
          %s565 = int_to_ptr.vmem [resolvable:$true] %s564
          %567 = dma.vmem_to_hbm [thread:$0]  %s565, 32, %s562, [#allocation10]
        $region64: #{rnn_run_sequence.1} parent=39 // pred_fallthru
          _
        // Predicated region
        $region65: #{rnn_run_sequence.1} parent=39 // pred_check
          %p568 = pneg %p201
        $region66: #{rnn_run_sequence.1} parent=39 // pred_check_branch
          %570 = sbr.rel (%p568) target = $region68
        $region67: #{rnn_run_sequence.1} parent=39 // pred_region
          %571 = dma.done [#allocation10], 32
        $region68: #{rnn_run_sequence.1} parent=39 // pred_fallthru
          _
      $region40: #{rnn_run_sequence.1} parent=5 // pred_fallthru
        _
      %p572 = scmp.le.s32.totalorder 2, %s21
      // Predicated region
      $region69: #{rnn_run_sequence.1} parent=5 // pred_check
        %p573 = pneg %p572
      $region70: #{rnn_run_sequence.1} parent=5 // pred_check_branch
        %575 = sbr.rel (%p573) target = $region72
      $region71: #{rnn_run_sequence.1} parent=5 // pred_region
        %s576 = ssub.s32 %s21, 2
        // Predicated region
        $region73: #{rnn_run_sequence.1} parent=71 // pred_check
          %p577 = pneg %p181
        $region74: #{rnn_run_sequence.1} parent=71 // pred_check_branch
          %579 = sbr.rel (%p577) target = $region76
        $region75: #{rnn_run_sequence.1} parent=71 // pred_region
          %s580 = sand.u32 %s166, 1
          %s581 = scalar_lea.sflag [#allocation4], %s580
          %s582 = sand.u32 %s166, 1
          %s583 = smul.addr %s582, 2
          %s584 = scalar_lea.vmem [#allocation8], %s583
          %585 = dma.done %s581, 32
        $region76: #{rnn_run_sequence.1} parent=71 // pred_fallthru
          _
      $region72: #{rnn_run_sequence.1} parent=5 // pred_fallthru
        _
    $region6: #{rnn_run_sequence.1} parent=1 // loop_footer
      %s25 = sadd.s32 1, %s21
    $region7: #{rnn_run_sequence.1} parent=1 // loop_footer_branch
      %20 = sbr.rel target = $region3
    $region8: #{rnn_run_sequence.1} parent=1 // loop_exit
      _
    %586 = vsyncpa [#allocation3], 1
    %s587 = scalar_lea.sflag [#allocation3], 1
    %588 = vsyncpa %s587, 1
    %589 = vsyncpa [#allocation6], 1
    %590 = vsyncpa [#allocation4], 1
    %s591 = scalar_lea.sflag [#allocation4], 1
    %592 = vsyncpa %s591, 1
    %593 = vsyncpa [#allocation10], 1

</llo_original>
